<compile_context>
chip_gen: v7x
topology: tpu7x:2x2x1
jax: 0.10.0
libtpu: 0.0.40
codegen_flags: <defaults>
</compile_context>

<pallas_src>
import functools
import math

import jax
import jax.numpy as jnp
from jax.experimental import pallas as pl
from jax.experimental.pallas import tpu as pltpu


def _pick_tile(n: int, cap: int) -> int:
    """Largest divisor of n that is <= cap, preferring multiples of 8."""
    cap = max(1, min(cap, n))
    best, best8 = 1, None
    for d in range(1, cap + 1):
        if n % d == 0:
            best = d
            if d % 8 == 0:
                best8 = d
    return best8 if best8 is not None else best


# ---------------------------------------------------------------------------
# Small-table fast path: VMEM-resident table, one-hot gather on the MXU.
# ---------------------------------------------------------------------------
def _small_table_kernel(tok_ref, table_ref, out_ref, *, scale, vocab):
    # tok_ref  : (st, 1)  int32 VMEM block
    # table_ref: (V, D)   VMEM (resident: same block every grid step)
    # out_ref  : (st, D)
    ids = tok_ref[...]                                                  # (st, 1)
    st = ids.shape[0]
    onehot = (ids == jax.lax.broadcasted_iota(jnp.int32, (st, vocab), 1)
              ).astype(table_ref.dtype)                                 # (st, V)
    emb = jnp.dot(onehot, table_ref[...], preferred_element_type=jnp.float32)
    out_ref[...] = (emb * scale).astype(out_ref.dtype)


def _small_table_path(tokens_flat, table, scale, vmem_limit_bytes):
    N = tokens_flat.shape[0]
    V, D = table.shape
    itemsize = jnp.dtype(table.dtype).itemsize

    st_cap = max(1, min(256, (2 << 20) // max(1, D * itemsize)))
    st = _pick_tile(N, st_cap)
    num_tiles = N // st

    if vmem_limit_bytes is None:
        usage = V * D * itemsize + 2 * st * D * itemsize + 2 * st * 4
        vmem_limit_bytes = min(48 << 20, max(16 << 20, 2 * usage))

    kernel = functools.partial(_small_table_kernel, scale=scale, vocab=V)
    return pl.pallas_call(
        kernel,
        out_shape=jax.ShapeDtypeStruct((N, D), table.dtype),
        grid=(num_tiles,),
        in_specs=[
            pl.BlockSpec((st, 1), lambda i: (i, 0)),
            pl.BlockSpec((V, D), lambda i: (0, 0)),   # constant block -> resident
        ],
        out_specs=pl.BlockSpec((st, D), lambda i: (i, 0)),
        compiler_params=pltpu.CompilerParams(
            dimension_semantics=("parallel",),
            vmem_limit_bytes=vmem_limit_bytes,
        ),
    )(tokens_flat.reshape(N, 1), table)


# ---------------------------------------------------------------------------
# Gather path: HBM table, double-buffered manual row-DMA gather.
# ---------------------------------------------------------------------------
def _gather_kernel(tok_ref, table_hbm, out_ref, buf, sems, *,
                   scale, seq_tile, tiles_per_group, seq_len):
    # tok_ref   : (B*S,) int32 SMEM (scalar prefetch, already clamped in wrapper)
    # table_hbm : (V, D) HBM ref (no auto-DMA)
    # out_ref   : (1, group_len, D) VMEM output block
    # buf       : (2, seq_tile, D)  VMEM double buffer
    # sems      : (2,) DMA semaphores, one per buffer slot
    group_len = seq_tile * tiles_per_group
    b = pl.program_id(0)
    g = pl.program_id(1)
    group_base = b * seq_len + g * group_len

    unroll = 8 if seq_tile % 8 == 0 else 1

    def issue_tile(t, slot):
        tile_base = group_base + t * seq_tile

        def issue_row(i, carry):
            tok = tok_ref[tile_base + i]
            pltpu.make_async_copy(
                table_hbm.at[pl.ds(tok, 1), :],        # one (1, D) row from HBM
                buf.at[slot, pl.ds(i, 1), :],
                sems.at[slot],
            ).start()
            return carry

        jax.lax.fori_loop(0, seq_tile, issue_row, 0, unroll=unroll)

    def wait_tile(slot):
        # All row copies of this tile share sems[slot]; DMA semaphores count bytes,
        # so one wait sized for the whole (seq_tile, D) slot retires all of them.
        pltpu.make_async_copy(buf.at[slot], buf.at[slot], sems.at[slot]).wait()

    issue_tile(0, 0)                                   # prime slot 0
    for t in range(tiles_per_group):                   # static, small (1-4)
        slot = t & 1
        if t + 1 < tiles_per_group:                    # prefetch next tile first
            issue_tile(t + 1, 1 - slot)
        wait_tile(slot)
        out_ref[0, pl.ds(t * seq_tile, seq_tile), :] = (
            buf[slot] * scale).astype(out_ref.dtype)


def _gather_path(tokens, table, scale, seq_tile, tiles_per_group, vmem_limit_bytes):
    B, S = tokens.shape
    V, D = table.shape
    itemsize = jnp.dtype(table.dtype).itemsize

    if seq_tile is None:
        cap = max(1, min(256, (2 << 20) // max(1, D * itemsize)))
        seq_tile = _pick_tile(S, cap)
    assert S % seq_tile == 0, "seq_tile must divide seq_len"
    num_tiles = S // seq_tile

    if tiles_per_group is None:
        tiles_per_group = 2 if (num_tiles % 2 == 0 and num_tiles >= 2) else 1
        # Keep the megacore-parallel axis >= 2 on single-batch inputs (v7x: 2 TCs).
        if B == 1 and num_tiles // tiles_per_group < 2 and num_tiles >= 2:
            tiles_per_group = 1
    assert num_tiles % tiles_per_group == 0
    num_groups = num_tiles // tiles_per_group
    group_len = seq_tile * tiles_per_group

    if vmem_limit_bytes is None:
        usage = (2 * seq_tile * D * itemsize          # double-buffered gather scratch
                 + 2 * group_len * D * itemsize)      # double-buffered output blocks
        vmem_limit_bytes = min(48 << 20, max(16 << 20, 2 * usage))

    kernel = functools.partial(
        _gather_kernel, scale=scale, seq_tile=seq_tile,
        tiles_per_group=tiles_per_group, seq_len=S)

    return pl.pallas_call(
        kernel,
        out_shape=jax.ShapeDtypeStruct((B, S, D), table.dtype),
        grid_spec=pltpu.PrefetchScalarGridSpec(
            num_scalar_prefetch=1,                     # flattened tokens -> SMEM
            grid=(B, num_groups),
            in_specs=[pl.BlockSpec(memory_space=pl.ANY)],   # table stays in HBM
            out_specs=pl.BlockSpec((1, group_len, D),
                                   lambda b, g, tok: (b, g, 0)),
            scratch_shapes=[
                pltpu.VMEM((2, seq_tile, D), table.dtype),
                pltpu.SemaphoreType.DMA((2,)),
            ],
        ),
        compiler_params=pltpu.CompilerParams(
            dimension_semantics=("parallel", "parallel"),
            vmem_limit_bytes=vmem_limit_bytes,
        ),
    )(tokens.reshape(B * S), table)


# ---------------------------------------------------------------------------
# Public wrapper (TokenEmbedding.forward equivalent).
# ---------------------------------------------------------------------------
def token_embedding(tokens, table, *, seq_tile=None, tiles_per_group=None,
                    small_table_bytes=4 << 20, vmem_limit_bytes=None):
    """tokens: (B, S) ints; table: (V, D) -> (B, S, D) = table[tokens] * sqrt(D)."""
    B, S = tokens.shape
    V, D = table.shape
    scale = float(math.sqrt(D))

    # TODO(synk): nn.Embedding raises on out-of-range ids; we clamp once here
    # (hoisted out of the kernel) so a bad id can never produce an OOB DMA.
    tokens = jnp.clip(tokens.astype(jnp.int32), 0, V - 1)

    table_bytes = V * D * jnp.dtype(table.dtype).itemsize
    if table_bytes <= small_table_bytes:
        out = _small_table_path(tokens.reshape(B * S), table, scale, vmem_limit_bytes)
        return out.reshape(B, S, D)

    # TODO(synk): for bf16/int8 tables, gather a (V, D/2) uint32 bitcast view so row
    # DMAs land on 32-bit sublane-aligned destinations (only f32 exercised here).
    return _gather_path(tokens, table, scale, seq_tile, tiles_per_group,
                        vmem_limit_bytes)


if __name__ == "__main__":
    B, S = 2, 8          # batch, seq_len
    V, D = 64, 32        # num_tokens, dim_model

    key = jax.random.PRNGKey(0)
    k_tok, k_emb = jax.random.split(key)

    tokens = jax.random.randint(k_tok, (B, S), 0, V, dtype=jnp.int32)
    table = jax.random.normal(k_emb, (V, D), dtype=jnp.float32)   # nn.Embedding: N(0,1)

    ref = jnp.take(table, tokens, axis=0) * math.sqrt(D)

    # 1) Small-table fast path (VMEM-resident table + one-hot MXU gather).
    out_small = jax.block_until_ready(token_embedding(tokens, table))
    assert out_small.shape == (B, S, D)
    assert jnp.allclose(out_small, ref, atol=1e-5, rtol=1e-5)

    # 2) Large-table gather path (HBM table, double-buffered row-DMA gather),
    #    forced here so both code paths compile and are verified.
    out_gather = jax.block_until_ready(
        token_embedding(tokens, table, seq_tile=4, small_table_bytes=0))
    assert out_gather.shape == (B, S, D)
    assert jnp.allclose(out_gather, ref, atol=1e-5, rtol=1e-5)

    print("KERNEL_OK")
</pallas_src>

<mosaic_0001>
module attributes {stable_mosaic.version = 11 : i64} {
  func.func @_small_table_kernel(%arg0: i32, %arg1: memref<16x1xi32, #tpu.memory_space<vmem>>, %arg2: memref<64x32xf32, #tpu.memory_space<vmem>>, %arg3: memref<16x32xf32, #tpu.memory_space<vmem>>) attributes {dimension_semantics = [#tpu.dimension_semantics<parallel>], iteration_bounds = array<i64: 1>, scalar_prefetch = 0 : i64, scratch_operands = 0 : i64, tpu.core_type = #tpu.core_type<tc>, window_params = [{transform_indices = @transform_0, window_bounds = array<i64: 16, 1>}, {pipeline_mode = #tpu.pipeline_mode<synchronous>, transform_indices = @transform_1, window_bounds = array<i64: 64, 32>}, {transform_indices = @transform_2, window_bounds = array<i64: 16, 32>}]} {
    %c0 = arith.constant 0 : index
    %c0_0 = arith.constant 0 : index
    %0 = vector.load %arg1[%c0, %c0_0] : memref<16x1xi32, #tpu.memory_space<vmem>>, vector<16x1xi32>
    %1 = tpu.iota {dimensions = array<i32: 1>} : vector<16x64xi32>
    %2 = vector.broadcast %0 : vector<16x1xi32> to vector<16x64xi32>
    %3 = arith.cmpi eq, %2, %1 : vector<16x64xi32>
    %4 = arith.extui %3 : vector<16x64xi1> to vector<16x64xi32>
    %5 = arith.sitofp %4 : vector<16x64xi32> to vector<16x64xf32>
    %c0_1 = arith.constant 0 : index
    %c0_2 = arith.constant 0 : index
    %6 = vector.load %arg2[%c0_1, %c0_2] : memref<64x32xf32, #tpu.memory_space<vmem>>, vector<64x32xf32>
    %cst = arith.constant dense<0.000000e+00> : vector<16x32xf32>
    %7 = tpu.matmul %5, %6, %cst {dimension_numbers = #tpu.dot_dimension_numbers<[1], [0], [0], [1], [0, 0, 1, 1], [], []>} : vector<16x64xf32>, vector<64x32xf32>, vector<16x32xf32> -> vector<16x32xf32>
    %cst_3 = arith.constant 5.65685415 : f32
    %8 = vector.broadcast %cst_3 : f32 to vector<16x32xf32>
    %9 = arith.mulf %7, %8 : vector<16x32xf32>
    %c0_4 = arith.constant 0 : index
    %c0_5 = arith.constant 0 : index
    %10 = vector.load %arg3[%c0_4, %c0_5] : memref<16x32xf32, #tpu.memory_space<vmem>>, vector<16x32xf32>
    tpu.vector_store %arg3[%c0_4, %c0_5], %9 {strides = array<i32>} : memref<16x32xf32, #tpu.memory_space<vmem>>, vector<16x32xf32>,
    return
  }
  func.func @transform_0(%arg0: i32) -> (i32, i32) {
    %c0_i32 = arith.constant 0 : i32
    %c0_i32_0 = arith.constant 0 : i32
    return %arg0, %c0_i32 : i32, i32
  }
  func.func @transform_1(%arg0: i32) -> (i32, i32) {
    %c0_i32 = arith.constant 0 : i32
    %c0_i32_0 = arith.constant 0 : i32
    %c0_i32_1 = arith.constant 0 : i32
    return %c0_i32, %c0_i32_0 : i32, i32
  }
  func.func @transform_2(%arg0: i32) -> (i32, i32) {
    %c0_i32 = arith.constant 0 : i32
    %c0_i32_0 = arith.constant 0 : i32
    return %arg0, %c0_i32 : i32, i32
  }
}

</mosaic_0001>

<llo_original>
// kernel: tpu_custom_call.1
$region0: #{tpu_custom_call.1}
  #allocation0 [shape = 'u32[]', space=smem, size = 0x4, offset = 0x4, fixed_abs, tag = 'smem constant byte address 0x4 - core index']
  #allocation1 [shape = 'u32[144,128]{1,0:T(1,128)}', space=vmem, size = 0x12000, scoped, tag = 'internal scratch']
  %s0 = inlined_call_operand.vmem [shape: s32[16,1], index: 0, kind: input, shape index: {}]
  %s1 = inlined_call_operand.vmem [shape: f32[64,32], index: 1, kind: input, shape index: {}]
  %s2 = inlined_call_operand.hbm [shape: f32[16,32], index: 2, kind: output, shape index: {}]
  %s3 = sld [smem:[#allocation0]]
  $region18: #{tpu_custom_call.1} parent=0
    _
  %s5 = ssub.s32 1, %s3
  %s6 = scalar_select 0, %s5, %s3
  $region1: #{tpu_custom_call.1} parent=0
    #allocation2 [shape = 'u8[8192]{0}', space=vmem, size = 0x2000, scoped, tag = 'output window, operand 0, single buffered']
    #allocation3 [shape = 's32[1]{0}', space=sflag, size = 0x4, scoped, tag = 'scoped memory for tpu_custom_call.1']
    %7 = vsyncpa [#allocation3], 0
    // Predicated region
    $region2: #{tpu_custom_call.1} parent=1 // pred_check
      _
    $region3: #{tpu_custom_call.1} parent=1 // pred_check_branch
      %9 = sbr.rel (0) target = $region5
    $region4: #{tpu_custom_call.1} parent=1 // pred_region
      _
    $region5: #{tpu_custom_call.1} parent=1 // pred_fallthru
      _
    // Predicated region
    $region6: #{tpu_custom_call.1} parent=1 // pred_check
      _
    $region7: #{tpu_custom_call.1} parent=1 // pred_check_branch
      %11 = sbr.rel (0) target = $region9
    $region8: #{tpu_custom_call.1} parent=1 // pred_region
      _
    $region9: #{tpu_custom_call.1} parent=1 // pred_fallthru
      _
    %v12 = vld [vmem:[%s0] sm:$0xff]
    %v13 = vld [vmem:[%s0 + $0x8] sm:$0xff]
    %v14 = vlaneseq
    %v15 = vand.u32 %v14, 127
    %16 = vset.pattern.permute.xlu0 0
    %17 = vperm.xlu0 %16, %v12
    %v18 = vpop.permute.xlu0 %17
    %19 = vset.pattern.permute.xlu0 0
    %20 = vperm.xlu0 %19, %v13
    %v21 = vpop.permute.xlu0 %20
    %vm22 = vcmp.eq.s32.totalorder %v18, %v15
    %vm23 = vcmp.eq.s32.totalorder %v21, %v15
    %v24 = vsel %vm22, 1, 0
    %v25 = vsel %vm23, 1, 0
    %v26 = vcvt.s32.f32 %v24
    %v27 = vcvt.s32.f32 %v25
    %v28 = vld [vmem:[%s1] sm:$0xff]
    %v29 = vld [vmem:[%s1 + $0x8] sm:$0xff]
    %v30 = vld [vmem:[%s1 + $0x10] sm:$0xff]
    %v31 = vld [vmem:[%s1 + $0x18] sm:$0xff]
    %v32 = vld [vmem:[%s1 + $0x20] sm:$0xff]
    %v33 = vld [vmem:[%s1 + $0x28] sm:$0xff]
    %v34 = vld [vmem:[%s1 + $0x30] sm:$0xff]
    %v35 = vld [vmem:[%s1 + $0x38] sm:$0xff]
    %vm36 = vcmask 523264
    %v38 = vsel %vm36, %v26, 0
    %v41 = vsel %vm36, %v27, 0
    %43 = vmatprep.subr.mxu0 0.0
    %44 = vmatpush1.msra.mxu0 %v28
    %45 = vmatprep.subr.mxu0 0.0
    %46 = vmatpush1.msra.mxu0 %v29
    %47 = vmatprep.subr.mxu0 0.0
    %48 = vmatpush1.msra.mxu0 %v30
    %49 = vmatprep.subr.mxu0 0.0
    %50 = vmatpush1.msra.mxu0 %v31
    %51 = vmatprep.subr.mxu0 0.0
    %52 = vmatpush1.msra.mxu0 %v32
    %53 = vmatprep.subr.mxu0 0.0
    %54 = vmatpush1.msra.mxu0 %v33
    %55 = vmatprep.subr.mxu0 0.0
    %56 = vmatpush1.msra.mxu0 %v34
    %57 = vmatprep.subr.mxu0 0.0
    %58 = vmatpush1.msra.mxu0 %v35
    %59 = vmatprep.subr.mxu0 0.0
    %60 = vmatpush1.msra.mxu0 0.0
    %61 = vmatprep.subr.mxu0 0.0
    %62 = vmatpush1.msra.mxu0 0.0
    %63 = vmatprep.subr.mxu0 0.0
    %64 = vmatpush1.msra.mxu0 0.0
    %65 = vmatprep.subr.mxu0 0.0
    %66 = vmatpush1.msra.mxu0 0.0
    %67 = vmatprep.subr.mxu0 0.0
    %68 = vmatpush1.msra.mxu0 0.0
    %69 = vmatprep.subr.mxu0 0.0
    %70 = vmatpush1.msra.mxu0 0.0
    %71 = vmatprep.subr.mxu0 0.0
    %72 = vmatpush1.msra.mxu0 0.0
    %73 = vmatprep.subr.mxu0 0.0
    %74 = vmatpush1.msra.mxu0 0.0
    %75 = vmatprep.subr.mxu0 0.0
    %76 = vmatpush1.msra.mxu0 0.0
    %77 = vmatprep.subr.mxu0 0.0
    %78 = vmatpush1.msra.mxu0 0.0
    %79 = vmatprep.subr.mxu0 0.0
    %80 = vmatpush1.msra.mxu0 0.0
    %81 = vmatprep.subr.mxu0 0.0
    %82 = vmatpush1.msra.mxu0 0.0
    %83 = vmatprep.subr.mxu0 0.0
    %84 = vmatpush1.msra.mxu0 0.0
    %85 = vmatprep.subr.mxu0 0.0
    %86 = vmatpush1.msra.mxu0 0.0
    %87 = vmatprep.subr.mxu0 0.0
    %88 = vmatpush1.msra.mxu0 0.0
    %89 = vmatprep.subr.mxu0 0.0
    %90 = vmatpush1.msra.mxu0 0.0
    %91 = vmatprep.subr.mxu0 0.0
    %92 = vmatpush1.msra.mxu0 0.0
    %93 = vmatprep.subr.mxu0 0.0
    %94 = vmatpush1.msra.mxu0 0.0
    %95 = vmatprep.subr.mxu0 0.0
    %96 = vmatpush1.msra.mxu0 0.0
    %97 = vmatprep.subr.mxu0 0.0
    %98 = vmatpush1.msra.mxu0 0.0
    %99 = vmatprep.subr.mxu0 0.0
    %100 = vmatpush1.msra.mxu0 0.0
    %101 = vmatprep.subr.mxu0 0.0
    %102 = vmatpush1.msra.mxu0 0.0
    %103 = vmatprep.subr.mxu0 0.0
    %104 = vmatpush1.msra.mxu0 0.0
    %105 = vmatprep.subr.mxu0 0.0
    %106 = vmatpush1.msra.mxu0 0.0
    %107 = vmatprep.mubr.f32.mxu0 0.0
    %108 = vmatmul.mubr.f32.gmra.mrb[0].mxu0 %v38
    %v109 = vpop.f32.mrb[0].mxu0
    %v110 = vadd.f32 0.0, %v109
    %v111 = vpop.f32.mrb[0].mxu0
    %112 = vmatprep.mubr.f32.mxu0 0.0
    %113 = vmatmul.mubr.f32.gmra.mrb[0].mxu0 %v41
    %v114 = vpop.f32.mrb[0].mxu0
    %v115 = vadd.f32 0.0, %v114
    %v116 = vpop.f32.mrb[0].mxu0
    %117 = vdwg.mxu0
    %v118 = vmul.f32 %v110, 5.656854
    %v119 = vmul.f32 %v115, 5.656854
    %vm120 = vcmask 261120
    %121 = vst.msk [vmem:[#allocation2] sm:$0xff] %vm120, %v118
    %122 = vst.msk [vmem:[#allocation2 + $0x8] sm:$0xff] %vm120, %v119
    // Predicated region
    $region10: #{tpu_custom_call.1} parent=1 // pred_check
      _
    $region11: #{tpu_custom_call.1} parent=1 // pred_check_branch
      %124 = sbr.rel (0) target = $region13
    $region12: #{tpu_custom_call.1} parent=1 // pred_region
      %s126 = ssub.s32 256, 256
      %127 = vsyncadd [#allocation3], %s126
      %s128 = sshll.u32 [#allocation2], 4
      %s129 = int_to_ptr.vmem [resolvable:$true] %s128
      %134 = dma.vmem_to_hbm [thread:$0]  %s129, 256, %s2, [#allocation3], 128, 128, 8
    $region13: #{tpu_custom_call.1} parent=1 // pred_fallthru
      _
    // Predicated region
    $region14: #{tpu_custom_call.1} parent=1 // pred_check
      _
    $region15: #{tpu_custom_call.1} parent=1 // pred_check_branch
      %136 = sbr.rel (0) target = $region17
    $region16: #{tpu_custom_call.1} parent=1 // pred_region
      %137 = dma.done [#allocation3], 256
    $region17: #{tpu_custom_call.1} parent=1 // pred_fallthru
      _
    %138 = vsyncpa [#allocation3], 1

</llo_original>
